<compile_context>
chip_gen: v7x
topology: tpu7x:2x2x1
jax: 0.10.0
libtpu: 0.0.40
codegen_flags: <defaults>
</compile_context>

<pallas_src>
import jax
import jax.numpy as jnp
from jax.experimental import pallas as pl
from jax.experimental.pallas import tpu as pltpu


# --------------------------------------------------------------------------- #
# Kernel
# --------------------------------------------------------------------------- #
def value_model_kernel(state_ref, src_ref, tgt_ref,
                       w_state_ref, w_mean_ref, w_std_ref, w_max_ref, b_ref,
                       out_ref):
    S = src_ref.shape[1]
    src = src_ref[...]                                    # (TB, S, C) native-dtype view

    # ---- pass 1: f32-accumulated sum -> mean ; max in native dtype ----------------
    s1 = jnp.sum(src, axis=1, dtype=jnp.float32)          # (TB, C)
    mean = s1 * (1.0 / S)
    mx = jnp.max(src, axis=1).astype(jnp.float32)         # (TB, C)

    # ---- pass 2: numerically-stable centered sum of squares (two-pass std) --------
    # src is already resident in VMEM; this costs VMEM reads only, no extra HBM.
    # NOTE: S == 1 divides by zero -> NaN, same as torch.std(unbiased=True).
    d = src.astype(jnp.float32) - mean[:, None, :]        # (TB, S, C) elementwise
    ss = jnp.sum(d * d, axis=1)                           # (TB, C)
    std = jnp.sqrt(ss * (1.0 / (S - 1)))
    # TODO(synk): if the vector-load slot ever saturates, fuse the three reductions
    # into one S-chunk sweep with lax.fori_loop(unroll=True) carrying 3 accumulators.

    # ---- fused linear as four small MXU dots (avoids lane-concat relayout) --------
    vm = (jnp.dot(state_ref[...].astype(jnp.float32), w_state_ref[...],
                  preferred_element_type=jnp.float32)
          + jnp.dot(mean, w_mean_ref[...], preferred_element_type=jnp.float32)
          + jnp.dot(std, w_std_ref[...], preferred_element_type=jnp.float32)
          + jnp.dot(mx, w_max_ref[...], preferred_element_type=jnp.float32)
          + b_ref[...])                                   # (TB, C) f32

    # ---- bmm(tgt_out_seq (TB,T,C), vm (TB,C,1)).squeeze() -> (TB, T) ---------------
    # tgt stays in its native dtype; the multiply against f32 vm promotes per-vreg.
    out_ref[...] = jnp.sum(tgt_ref[...] * vm[:, None, :], axis=-1).astype(out_ref.dtype)
    # TODO(synk): T is far below 128 lanes -> masked vst; a lane-dense (T, TB) output
    # layout is possible but output bytes are a tiny fraction of traffic here.


# --------------------------------------------------------------------------- #
# Tiling / VMEM helpers
# --------------------------------------------------------------------------- #
def _round_up(x, m):
    return (x + m - 1) // m * m


def _sublane_quantum(itemsize):
    # 32-bit: 8 sublanes; bf16/fp16 pack 16; int8/fp8 pack 32.
    return 8 if itemsize >= 4 else (16 if itemsize == 2 else 32)


def _vmem_limit_bytes():
    """Generation-gated scoped-VMEM limit: 64 MiB on v5e/v6e (128 MiB physical),
    32 MiB on v7x (64 MiB physical) or when the query is unavailable."""
    try:
        info = pltpu.get_tpu_info()
        phys = getattr(info, "vmem_capacity_bytes", 0) or 0
        if phys >= 96 * 1024 * 1024:
            return 64 * 1024 * 1024
    except Exception:
        pass
    return 32 * 1024 * 1024


def _pick_batch_tile(B, S, T, C, Sd, seq_itemsize, state_itemsize, vmem_budget):
    """Pick the batch tile from PADDED VMEM bytes (lane dim -> 128, sublane dim ->
    dtype quantum), accounting for double-buffered I/O blocks plus the single
    in-kernel f32 centered-src intermediate, while keeping >= 2-4 grid steps."""
    lane = 128
    seq_sub = _sublane_quantum(seq_itemsize)
    # TB is the second-to-last dim of the 2-D state/out blocks: 8-align for f32,
    # 16/32 when the state dtype packs along sublanes.
    align = max(8, _sublane_quantum(state_itemsize))

    C_pad = _round_up(C, lane)
    Sd_pad = _round_up(Sd, lane)
    T_pad = _round_up(T, lane)
    S_pad = _round_up(S, seq_sub)
    Tr_pad = _round_up(T, seq_sub)

    # Padded bytes per batch row for the pipelined (double-buffered) blocks.
    per_row_io = (seq_itemsize * C_pad * (S_pad + Tr_pad)   # src + tgt blocks
                  + state_itemsize * Sd_pad                 # state block
                  + 4 * T_pad)                              # f32 output block
    # In-kernel f32 intermediate (centered src slab), single-buffered.
    per_row_tmp = 4 * S_pad * C_pad

    tb_fit = max(1, vmem_budget // (2 * per_row_io + per_row_tmp))

    if B <= align:
        return B                      # tiny batch: one full-block step (block == full dim)

    # Keep >= 4 grid steps (>= 2 at minimum) so megacore sharding and the software
    # pipeline (prefetch i+1 / writeback i-1) have work on every generation.
    steps = 4 if B >= 4 * align else 2
    tb_steps = -(-B // steps)         # cdiv

    tb = min(tb_fit, tb_steps, B)
    tb = max(align, (tb // align) * align)
    return B if tb >= B else tb


# --------------------------------------------------------------------------- #
# Wrapper
# --------------------------------------------------------------------------- #
def value_model_forward(params, state_features, src_seq, src_src_mask,
                        tgt_in_seq, tgt_out_seq, tgt_out_idx):
    # src_src_mask, tgt_in_seq, tgt_out_idx are unused (same as the PyTorch forward).
    del src_src_mask, tgt_in_seq, tgt_out_idx

    B, S, C = src_seq.shape
    T = tgt_out_seq.shape[1]
    Sd = state_features.shape[1]
    assert S > 1, "src_seq length 1 -> torch.std(unbiased=True) is NaN"

    vmem_limit = _vmem_limit_bytes()
    budget = (vmem_limit * 3) // 4          # headroom for weights, bias, spill slack
    TB = _pick_batch_tile(B, S, T, C, Sd,
                          seq_itemsize=src_seq.dtype.itemsize,
                          state_itemsize=state_features.dtype.itemsize,
                          vmem_budget=budget)
    grid = (pl.cdiv(B, TB),)

    return pl.pallas_call(
        value_model_kernel,
        out_shape=jax.ShapeDtypeStruct((B, T), jnp.float32),
        grid=grid,
        in_specs=[
            pl.BlockSpec((TB, Sd), lambda i: (i, 0)),          # state     (tiled over B)
            pl.BlockSpec((TB, S, C), lambda i: (i, 0, 0)),     # src_seq   (tiled over B)
            pl.BlockSpec((TB, T, C), lambda i: (i, 0, 0)),     # tgt_out   (tiled over B)
            pl.BlockSpec((Sd, C), lambda i: (0, 0)),           # W^T[:Sd]      (resident)
            pl.BlockSpec((C, C), lambda i: (0, 0)),            # W^T[mean]     (resident)
            pl.BlockSpec((C, C), lambda i: (0, 0)),            # W^T[std]      (resident)
            pl.BlockSpec((C, C), lambda i: (0, 0)),            # W^T[max]      (resident)
            pl.BlockSpec((1, C), lambda i: (0, 0)),            # bias          (resident)
        ],
        out_specs=pl.BlockSpec((TB, T), lambda i: (i, 0)),
        compiler_params=pltpu.CompilerParams(
            dimension_semantics=("parallel",),   # >=2 grid steps -> v7x can split batch
            vmem_limit_bytes=vmem_limit,
        ),
    )(state_features, src_seq, tgt_out_seq,
      params["w_state"], params["w_mean"], params["w_std"], params["w_max"],
      params["bias2d"])


# --------------------------------------------------------------------------- #
# Params / reference
# --------------------------------------------------------------------------- #
def init_params(key, state_feat_dim, candidate_feat_dim):
    """Deterministic init matching nn.Linear(state+3*cand, cand) shapes.
    Weight: xavier_uniform; bias: uniform(+-1/sqrt(fan_in)) like PyTorch default.
    The transposed, pre-split weight slices used by the kernel are built once here."""
    Sd, C = state_feat_dim, candidate_feat_dim
    fan_in = Sd + 3 * C
    fan_out = C
    kw, kb = jax.random.split(key)
    bound_w = (6.0 / (fan_in + fan_out)) ** 0.5
    weight = jax.random.uniform(kw, (fan_out, fan_in), jnp.float32, -bound_w, bound_w)
    bound_b = 1.0 / (fan_in ** 0.5)
    bias = jax.random.uniform(kb, (fan_out,), jnp.float32, -bound_b, bound_b)

    wt = jnp.transpose(weight)                  # (Sd + 3C, C)
    return {
        "weight": weight,                       # (C, Sd + 3C)  -- reference layout
        "bias": bias,                           # (C,)
        "w_state": wt[:Sd],                     # (Sd, C)
        "w_mean": wt[Sd:Sd + C],                # (C, C)
        "w_std": wt[Sd + C:Sd + 2 * C],         # (C, C)
        "w_max": wt[Sd + 2 * C:],               # (C, C)
        "bias2d": bias.reshape(1, C),           # (1, C)
    }


def reference_forward(params, state_features, src_seq, tgt_out_seq):
    mean = jnp.mean(src_seq, axis=1)
    std = jnp.std(src_seq, axis=1, ddof=1)
    mx = jnp.max(src_seq, axis=1)
    feats = jnp.concatenate([state_features, mean, std, mx], axis=1)
    vm = feats @ params["weight"].T + params["bias"]
    return jnp.einsum("btc,bc->bt", tgt_out_seq, vm)


# --------------------------------------------------------------------------- #
# Demo / correctness check
# --------------------------------------------------------------------------- #
def _run_case(key, batch, state_feat_dim, candidate_feat_dim,
              max_src_seq_len, max_tgt_seq_len, params):
    k_state, k_src, k_tgt_in, k_tgt_out = jax.random.split(key, 4)
    state_features = jax.random.normal(k_state, (batch, state_feat_dim), jnp.float32)
    src_seq = jax.random.normal(k_src, (batch, max_src_seq_len, candidate_feat_dim), jnp.float32)
    src_src_mask = jnp.ones((batch, max_src_seq_len, max_src_seq_len), jnp.float32)   # unused
    tgt_in_seq = jax.random.normal(k_tgt_in, (batch, max_tgt_seq_len, candidate_feat_dim),
                                   jnp.float32)                                       # unused
    tgt_out_seq = jax.random.normal(k_tgt_out, (batch, max_tgt_seq_len, candidate_feat_dim),
                                    jnp.float32)
    tgt_out_idx = jnp.zeros((batch, max_tgt_seq_len), jnp.int32)                      # unused

    out = value_model_forward(params, state_features, src_seq, src_src_mask,
                              tgt_in_seq, tgt_out_seq, tgt_out_idx)
    out = jax.block_until_ready(out)
    ref = reference_forward(params, state_features, src_seq, tgt_out_seq)
    assert out.shape == (batch, max_tgt_seq_len)
    assert jnp.allclose(out, ref, atol=1e-4, rtol=1e-4), "mismatch vs pure-JAX reference"


if __name__ == "__main__":
    state_feat_dim = 8
    candidate_feat_dim = 16
    hidden_size = 32          # stored by the module but unused in forward
    max_src_seq_len = 12
    max_tgt_seq_len = 6

    key = jax.random.PRNGKey(0)
    k_params, k_small, k_big = jax.random.split(key, 3)
    params = init_params(k_params, state_feat_dim, candidate_feat_dim)

    # Small shapes consistent with the module (single grid step, block == full batch).
    _run_case(k_small, 2, state_feat_dim, candidate_feat_dim,
              max_src_seq_len, max_tgt_seq_len, params)

    # Larger batch exercising the tiled, multi-step (pipelined / megacore) grid path.
    _run_case(k_big, 64, state_feat_dim, candidate_feat_dim,
              max_src_seq_len, max_tgt_seq_len, params)

    print("KERNEL_OK")
</pallas_src>

<mosaic_0001>
module attributes {stable_mosaic.version = 11 : i64} {
  func.func @value_model_kernel(%arg0: i32, %arg1: memref<2x8xf32, #tpu.memory_space<vmem>>, %arg2: memref<2x12x16xf32, #tpu.memory_space<vmem>>, %arg3: memref<2x6x16xf32, #tpu.memory_space<vmem>>, %arg4: memref<8x16xf32, #tpu.memory_space<vmem>>, %arg5: memref<16x16xf32, #tpu.memory_space<vmem>>, %arg6: memref<16x16xf32, #tpu.memory_space<vmem>>, %arg7: memref<16x16xf32, #tpu.memory_space<vmem>>, %arg8: memref<1x16xf32, #tpu.memory_space<vmem>>, %arg9: memref<2x6xf32, #tpu.memory_space<vmem>>) attributes {dimension_semantics = [#tpu.dimension_semantics<parallel>], iteration_bounds = array<i64: 1>, scalar_prefetch = 0 : i64, scratch_operands = 0 : i64, tpu.core_type = #tpu.core_type<tc>, window_params = [{transform_indices = @transform_0, window_bounds = array<i64: 2, 8>}, {transform_indices = @transform_1, window_bounds = array<i64: 2, 12, 16>}, {transform_indices = @transform_2, window_bounds = array<i64: 2, 6, 16>}, {pipeline_mode = #tpu.pipeline_mode<synchronous>, transform_indices = @transform_3, window_bounds = array<i64: 8, 16>}, {pipeline_mode = #tpu.pipeline_mode<synchronous>, transform_indices = @transform_4, window_bounds = array<i64: 16, 16>}, {pipeline_mode = #tpu.pipeline_mode<synchronous>, transform_indices = @transform_5, window_bounds = array<i64: 16, 16>}, {pipeline_mode = #tpu.pipeline_mode<synchronous>, transform_indices = @transform_6, window_bounds = array<i64: 16, 16>}, {pipeline_mode = #tpu.pipeline_mode<synchronous>, transform_indices = @transform_7, window_bounds = array<i64: 1, 16>}, {transform_indices = @transform_8, window_bounds = array<i64: 2, 6>}]} {
    %c0 = arith.constant 0 : index
    %c0_0 = arith.constant 0 : index
    %c0_1 = arith.constant 0 : index
    %0 = vector.load %arg2[%c0, %c0_0, %c0_1] : memref<2x12x16xf32, #tpu.memory_space<vmem>>, vector<2x12x16xf32>
    %cst = arith.constant dense<0.000000e+00> : vector<2x16xf32>
    %1 = vector.multi_reduction <add>, %0, %cst [1] : vector<2x12x16xf32> to vector<2x16xf32>
    %cst_2 = arith.constant 0.0833333358 : f32
    %2 = vector.broadcast %cst_2 : f32 to vector<2x16xf32>
    %3 = arith.mulf %1, %2 : vector<2x16xf32>
    %cst_3 = arith.constant dense<0xFF800000> : vector<2x16xf32>
    %4 = vector.multi_reduction <maximumf>, %0, %cst_3 [1] : vector<2x12x16xf32> to vector<2x16xf32>
    %5 = vector.shape_cast %3 : vector<2x16xf32> to vector<2x1x16xf32>
    %6 = vector.broadcast %5 : vector<2x1x16xf32> to vector<2x12x16xf32>
    %7 = arith.subf %0, %6 : vector<2x12x16xf32>
    %8 = arith.mulf %7, %7 : vector<2x12x16xf32>
    %cst_4 = arith.constant dense<0.000000e+00> : vector<2x16xf32>
    %9 = vector.multi_reduction <add>, %8, %cst_4 [1] : vector<2x12x16xf32> to vector<2x16xf32>
    %cst_5 = arith.constant 0.0909090936 : f32
    %10 = vector.broadcast %cst_5 : f32 to vector<2x16xf32>
    %11 = arith.mulf %9, %10 : vector<2x16xf32>
    %12 = math.sqrt %11 : vector<2x16xf32>
    %c0_6 = arith.constant 0 : index
    %c0_7 = arith.constant 0 : index
    %13 = vector.load %arg1[%c0_6, %c0_7] : memref<2x8xf32, #tpu.memory_space<vmem>>, vector<2x8xf32>
    %c0_8 = arith.constant 0 : index
    %c0_9 = arith.constant 0 : index
    %14 = vector.load %arg4[%c0_8, %c0_9] : memref<8x16xf32, #tpu.memory_space<vmem>>, vector<8x16xf32>
    %cst_10 = arith.constant dense<0.000000e+00> : vector<2x16xf32>
    %15 = tpu.matmul %13, %14, %cst_10 {dimension_numbers = #tpu.dot_dimension_numbers<[1], [0], [0], [1], [0, 0, 1, 1], [], []>} : vector<2x8xf32>, vector<8x16xf32>, vector<2x16xf32> -> vector<2x16xf32>
    %c0_11 = arith.constant 0 : index
    %c0_12 = arith.constant 0 : index
    %16 = vector.load %arg5[%c0_11, %c0_12] : memref<16x16xf32, #tpu.memory_space<vmem>>, vector<16x16xf32>
    %cst_13 = arith.constant dense<0.000000e+00> : vector<2x16xf32>
    %17 = tpu.matmul %3, %16, %cst_13 {dimension_numbers = #tpu.dot_dimension_numbers<[1], [0], [0], [1], [0, 0, 1, 1], [], []>} : vector<2x16xf32>, vector<16x16xf32>, vector<2x16xf32> -> vector<2x16xf32>
    %18 = arith.addf %15, %17 : vector<2x16xf32>
    %c0_14 = arith.constant 0 : index
    %c0_15 = arith.constant 0 : index
    %19 = vector.load %arg6[%c0_14, %c0_15] : memref<16x16xf32, #tpu.memory_space<vmem>>, vector<16x16xf32>
    %cst_16 = arith.constant dense<0.000000e+00> : vector<2x16xf32>
    %20 = tpu.matmul %12, %19, %cst_16 {dimension_numbers = #tpu.dot_dimension_numbers<[1], [0], [0], [1], [0, 0, 1, 1], [], []>} : vector<2x16xf32>, vector<16x16xf32>, vector<2x16xf32> -> vector<2x16xf32>
    %21 = arith.addf %18, %20 : vector<2x16xf32>
    %c0_17 = arith.constant 0 : index
    %c0_18 = arith.constant 0 : index
    %22 = vector.load %arg7[%c0_17, %c0_18] : memref<16x16xf32, #tpu.memory_space<vmem>>, vector<16x16xf32>
    %cst_19 = arith.constant dense<0.000000e+00> : vector<2x16xf32>
    %23 = tpu.matmul %4, %22, %cst_19 {dimension_numbers = #tpu.dot_dimension_numbers<[1], [0], [0], [1], [0, 0, 1, 1], [], []>} : vector<2x16xf32>, vector<16x16xf32>, vector<2x16xf32> -> vector<2x16xf32>
    %24 = arith.addf %21, %23 : vector<2x16xf32>
    %c0_20 = arith.constant 0 : index
    %c0_21 = arith.constant 0 : index
    %25 = vector.load %arg8[%c0_20, %c0_21] : memref<1x16xf32, #tpu.memory_space<vmem>>, vector<1x16xf32>
    %26 = vector.broadcast %25 : vector<1x16xf32> to vector<2x16xf32>
    %27 = arith.addf %24, %26 : vector<2x16xf32>
    %c0_22 = arith.constant 0 : index
    %c0_23 = arith.constant 0 : index
    %c0_24 = arith.constant 0 : index
    %28 = vector.load %arg3[%c0_22, %c0_23, %c0_24] : memref<2x6x16xf32, #tpu.memory_space<vmem>>, vector<2x6x16xf32>
    %29 = vector.shape_cast %27 : vector<2x16xf32> to vector<2x1x16xf32>
    %30 = vector.broadcast %29 : vector<2x1x16xf32> to vector<2x6x16xf32>
    %31 = arith.mulf %28, %30 : vector<2x6x16xf32>
    %cst_25 = arith.constant dense<0.000000e+00> : vector<2x6xf32>
    %32 = vector.multi_reduction <add>, %31, %cst_25 [2] : vector<2x6x16xf32> to vector<2x6xf32>
    %c0_26 = arith.constant 0 : index
    %c0_27 = arith.constant 0 : index
    %33 = vector.load %arg9[%c0_26, %c0_27] : memref<2x6xf32, #tpu.memory_space<vmem>>, vector<2x6xf32>
    tpu.vector_store %arg9[%c0_26, %c0_27], %32 {strides = array<i32>} : memref<2x6xf32, #tpu.memory_space<vmem>>, vector<2x6xf32>,
    return
  }
  func.func @transform_0(%arg0: i32) -> (i32, i32) {
    %c0_i32 = arith.constant 0 : i32
    %c0_i32_0 = arith.constant 0 : i32
    return %arg0, %c0_i32 : i32, i32
  }
  func.func @transform_1(%arg0: i32) -> (i32, i32, i32) {
    %c0_i32 = arith.constant 0 : i32
    %c0_i32_0 = arith.constant 0 : i32
    %c0_i32_1 = arith.constant 0 : i32
    return %arg0, %c0_i32, %c0_i32_0 : i32, i32, i32
  }
  func.func @transform_2(%arg0: i32) -> (i32, i32, i32) {
    %c0_i32 = arith.constant 0 : i32
    %c0_i32_0 = arith.constant 0 : i32
    %c0_i32_1 = arith.constant 0 : i32
    return %arg0, %c0_i32, %c0_i32_0 : i32, i32, i32
  }
  func.func @transform_3(%arg0: i32) -> (i32, i32) {
    %c0_i32 = arith.constant 0 : i32
    %c0_i32_0 = arith.constant 0 : i32
    %c0_i32_1 = arith.constant 0 : i32
    return %c0_i32, %c0_i32_0 : i32, i32
  }
  func.func @transform_4(%arg0: i32) -> (i32, i32) {
    %c0_i32 = arith.constant 0 : i32
    %c0_i32_0 = arith.constant 0 : i32
    %c0_i32_1 = arith.constant 0 : i32
    return %c0_i32, %c0_i32_0 : i32, i32
  }
  func.func @transform_5(%arg0: i32) -> (i32, i32) {
    %c0_i32 = arith.constant 0 : i32
    %c0_i32_0 = arith.constant 0 : i32
    %c0_i32_1 = arith.constant 0 : i32
    return %c0_i32, %c0_i32_0 : i32, i32
  }
  func.func @transform_6(%arg0: i32) -> (i32, i32) {
    %c0_i32 = arith.constant 0 : i32
    %c0_i32_0 = arith.constant 0 : i32
    %c0_i32_1 = arith.constant 0 : i32
    return %c0_i32, %c0_i32_0 : i32, i32
  }
  func.func @transform_7(%arg0: i32) -> (i32, i32) {
    %c0_i32 = arith.constant 0 : i32
    %c0_i32_0 = arith.constant 0 : i32
    %c0_i32_1 = arith.constant 0 : i32
    return %c0_i32, %c0_i32_0 : i32, i32
  }
  func.func @transform_8(%arg0: i32) -> (i32, i32) {
    %c0_i32 = arith.constant 0 : i32
    %c0_i32_0 = arith.constant 0 : i32
    return %arg0, %c0_i32 : i32, i32
  }
}

</mosaic_0001>

<llo_original>
// kernel: tpu_custom_call.1
$region0: #{tpu_custom_call.1}
  #allocation0 [shape = 'u32[]', space=smem, size = 0x4, offset = 0x4, fixed_abs, tag = 'smem constant byte address 0x4 - core index']
  #allocation1 [shape = 'u32[144,128]{1,0:T(1,128)}', space=vmem, size = 0x12000, scoped, tag = 'internal scratch']
  %s0 = inlined_call_operand.vmem [shape: f32[2,8], index: 0, kind: input, shape index: {}]
  %s1 = inlined_call_operand.vmem [shape: f32[2,12,16], index: 1, kind: input, shape index: {}]
  %s2 = inlined_call_operand.vmem [shape: f32[2,6,16], index: 2, kind: input, shape index: {}]
  %s3 = inlined_call_operand.vmem [shape: f32[8,16], index: 3, kind: input, shape index: {}]
  %s4 = inlined_call_operand.vmem [shape: f32[16,16], index: 4, kind: input, shape index: {}]
  %s5 = inlined_call_operand.vmem [shape: f32[16,16], index: 5, kind: input, shape index: {}]
  %s6 = inlined_call_operand.vmem [shape: f32[16,16], index: 6, kind: input, shape index: {}]
  %s7 = inlined_call_operand.vmem [shape: f32[1,16], index: 7, kind: input, shape index: {}]
  %s8 = inlined_call_operand.hbm [shape: f32[2,6], index: 8, kind: output, shape index: {}]
  %s9 = sld [smem:[#allocation0]]
  $region42: #{tpu_custom_call.1} parent=0
    _
  %s11 = ssub.s32 1, %s9
  %s12 = scalar_select 0, %s11, %s9
  $region1: #{tpu_custom_call.1} parent=0
    #allocation2 [shape = 'u8[1024]{0}', space=vmem, size = 0x400, scoped, tag = 'output window, operand 0, single buffered']
    #allocation3 [shape = 's32[1]{0}', space=sflag, size = 0x4, scoped, tag = 'scoped memory for tpu_custom_call.1']
    %13 = vsyncpa [#allocation3], 0
    // Predicated region
    $region2: #{tpu_custom_call.1} parent=1 // pred_check
      _
    $region3: #{tpu_custom_call.1} parent=1 // pred_check_branch
      %15 = sbr.rel (0) target = $region5
    $region4: #{tpu_custom_call.1} parent=1 // pred_region
      _
    $region5: #{tpu_custom_call.1} parent=1 // pred_fallthru
      _
    // Predicated region
    $region6: #{tpu_custom_call.1} parent=1 // pred_check
      _
    $region7: #{tpu_custom_call.1} parent=1 // pred_check_branch
      %17 = sbr.rel (0) target = $region9
    $region8: #{tpu_custom_call.1} parent=1 // pred_region
      _
    $region9: #{tpu_custom_call.1} parent=1 // pred_fallthru
      _
    // Predicated region
    $region10: #{tpu_custom_call.1} parent=1 // pred_check
      _
    $region11: #{tpu_custom_call.1} parent=1 // pred_check_branch
      %19 = sbr.rel (0) target = $region13
    $region12: #{tpu_custom_call.1} parent=1 // pred_region
      _
    $region13: #{tpu_custom_call.1} parent=1 // pred_fallthru
      _
    // Predicated region
    $region14: #{tpu_custom_call.1} parent=1 // pred_check
      _
    $region15: #{tpu_custom_call.1} parent=1 // pred_check_branch
      %21 = sbr.rel (0) target = $region17
    $region16: #{tpu_custom_call.1} parent=1 // pred_region
      _
    $region17: #{tpu_custom_call.1} parent=1 // pred_fallthru
      _
    // Predicated region
    $region18: #{tpu_custom_call.1} parent=1 // pred_check
      _
    $region19: #{tpu_custom_call.1} parent=1 // pred_check_branch
      %23 = sbr.rel (0) target = $region21
    $region20: #{tpu_custom_call.1} parent=1 // pred_region
      _
    $region21: #{tpu_custom_call.1} parent=1 // pred_fallthru
      _
    // Predicated region
    $region22: #{tpu_custom_call.1} parent=1 // pred_check
      _
    $region23: #{tpu_custom_call.1} parent=1 // pred_check_branch
      %25 = sbr.rel (0) target = $region25
    $region24: #{tpu_custom_call.1} parent=1 // pred_region
      _
    $region25: #{tpu_custom_call.1} parent=1 // pred_fallthru
      _
    // Predicated region
    $region26: #{tpu_custom_call.1} parent=1 // pred_check
      _
    $region27: #{tpu_custom_call.1} parent=1 // pred_check_branch
      %27 = sbr.rel (0) target = $region29
    $region28: #{tpu_custom_call.1} parent=1 // pred_region
      _
    $region29: #{tpu_custom_call.1} parent=1 // pred_fallthru
      _
    // Predicated region
    $region30: #{tpu_custom_call.1} parent=1 // pred_check
      _
    $region31: #{tpu_custom_call.1} parent=1 // pred_check_branch
      %29 = sbr.rel (0) target = $region33
    $region32: #{tpu_custom_call.1} parent=1 // pred_region
      _
    $region33: #{tpu_custom_call.1} parent=1 // pred_fallthru
      _
    %v30 = vld [vmem:[%s1] sm:$0xff]
    %v31 = vld [vmem:[%s1 + $0x8] sm:$0xf]
    %v32 = vld [vmem:[%s1 + $0x10] sm:$0xff]
    %v33 = vld [vmem:[%s1 + $0x18] sm:$0xf]
    %vm34 = vcmask 130048
    %v35 = vsel %vm34, %v30, 0.0
    %vm36 = vcmask 125952
    %v37 = vsel %vm36, %v31, 0.0
    %v38 = vadd.f32 %v35, %v37
    %v39 = vrot.slane %v38, 4
    %v40 = vadd.f32 %v38, %v39
    %v41 = vrot.slane %v40, 2
    %v42 = vadd.f32 %v40, %v41
    %v43 = vrot.slane %v42, 1
    %v44 = vadd.f32 %v42, %v43
    %v45 = vsel %vm34, %v32, 0.0
    %v46 = vsel %vm36, %v33, 0.0
    %v47 = vadd.f32 %v45, %v46
    %v48 = vrot.slane %v47, 4
    %v49 = vadd.f32 %v47, %v48
    %v50 = vrot.slane %v49, 2
    %v51 = vadd.f32 %v49, %v50
    %v52 = vrot.slane %v51, 1
    %v53 = vadd.f32 %v51, %v52
    %v54 = vmul.f32 %v44, 0.083333336
    %v55 = vmul.f32 %v53, 0.083333336
    %v56 = vsel %vm34, %v30, -inf
    %v57 = vsel %vm36, %v31, -inf
    %v58 = vmax.f32 %v56, %v57
    %v59 = vrot.slane %v58, 4
    %v60 = vmax.f32 %v58, %v59
    %v61 = vrot.slane %v60, 2
    %v62 = vmax.f32 %v60, %v61
    %v63 = vrot.slane %v62, 1
    %v64 = vmax.f32 %v62, %v63
    %v65 = vsel %vm34, %v32, -inf
    %v66 = vsel %vm36, %v33, -inf
    %v67 = vmax.f32 %v65, %v66
    %v68 = vrot.slane %v67, 4
    %v69 = vmax.f32 %v67, %v68
    %v70 = vrot.slane %v69, 2
    %v71 = vmax.f32 %v69, %v70
    %v72 = vrot.slane %v71, 1
    %v73 = vmax.f32 %v71, %v72
    %v74 = vsub.f32 %v30, %v54
    %v75 = vsub.f32 %v31, %v54
    %v76 = vsub.f32 %v32, %v55
    %v77 = vsub.f32 %v33, %v55
    %v78 = vmul.f32 %v74, %v74
    %v79 = vmul.f32 %v75, %v75
    %v80 = vmul.f32 %v76, %v76
    %v81 = vmul.f32 %v77, %v77
    %v82 = vsel %vm34, %v78, 0.0
    %v83 = vsel %vm36, %v79, 0.0
    %v84 = vadd.f32 %v82, %v83
    %v85 = vrot.slane %v84, 4
    %v86 = vadd.f32 %v84, %v85
    %v87 = vrot.slane %v86, 2
    %v88 = vadd.f32 %v86, %v87
    %v89 = vrot.slane %v88, 1
    %v90 = vadd.f32 %v88, %v89
    %v91 = vsel %vm34, %v80, 0.0
    %v92 = vsel %vm36, %v81, 0.0
    %v93 = vadd.f32 %v91, %v92
    %v94 = vrot.slane %v93, 4
    %v95 = vadd.f32 %v93, %v94
    %v96 = vrot.slane %v95, 2
    %v97 = vadd.f32 %v95, %v96
    %v98 = vrot.slane %v97, 1
    %v99 = vadd.f32 %v97, %v98
    %v100 = vmul.f32 %v90, 0.09090909
    %v101 = vmul.f32 %v99, 0.09090909
    %v102 = vrsqrt.pop %v100
    %v103 = vmul.f32 %v100, %v102
    %vm104 = vcmp.eq.f32.partialorder %v100, inf
    %v105 = vsel %vm104, %v100, %v103
    %vm106 = vcmp.eq.f32.partialorder %v100, 0.0
    %v107 = vand.u32 %v100, 2147483648
    %v108 = vsel %vm106, %v107, %v105
    %v109 = vrsqrt.pop %v101
    %v110 = vmul.f32 %v101, %v109
    %vm111 = vcmp.eq.f32.partialorder %v101, inf
    %v112 = vsel %vm111, %v101, %v110
    %vm113 = vcmp.eq.f32.partialorder %v101, 0.0
    %v114 = vand.u32 %v101, 2147483648
    %v115 = vsel %vm113, %v114, %v112
    %v116 = vld [vmem:[%s0] sm:$0x3]
    %v117 = vld [vmem:[%s3] sm:$0xff]
    %v118 = vld [vmem:[%s4] sm:$0xff]
    %v119 = vld [vmem:[%s4 + $0x8] sm:$0xff]
    %vm122 = vcmask 1041409
    %v123 = vsel %vm122, %v55, %v54
    %v124 = vsel %vm34, %v123, 0
    %126 = vmatprep.subr.mxu0 0.0
    %127 = vmatpush1.msra.mxu0 %v118
    %128 = vmatprep.subr.mxu0 0.0
    %129 = vmatpush1.msra.mxu0 %v119
    %130 = vmatprep.subr.mxu0 0.0
    %131 = vmatpush1.msra.mxu0 0.0
    %132 = vmatprep.subr.mxu0 0.0
    %133 = vmatpush1.msra.mxu0 0.0
    %134 = vmatprep.subr.mxu0 0.0
    %135 = vmatpush1.msra.mxu0 0.0
    %136 = vmatprep.subr.mxu0 0.0
    %137 = vmatpush1.msra.mxu0 0.0
    %138 = vmatprep.subr.mxu0 0.0
    %139 = vmatpush1.msra.mxu0 0.0
    %140 = vmatprep.subr.mxu0 0.0
    %141 = vmatpush1.msra.mxu0 0.0
    %142 = vmatprep.subr.mxu0 0.0
    %143 = vmatpush1.msra.mxu0 0.0
    %144 = vmatprep.subr.mxu0 0.0
    %145 = vmatpush1.msra.mxu0 0.0
    %146 = vmatprep.subr.mxu0 0.0
    %147 = vmatpush1.msra.mxu0 0.0
    %148 = vmatprep.subr.mxu0 0.0
    %149 = vmatpush1.msra.mxu0 0.0
    %150 = vmatprep.subr.mxu0 0.0
    %151 = vmatpush1.msra.mxu0 0.0
    %152 = vmatprep.subr.mxu0 0.0
    %153 = vmatpush1.msra.mxu0 0.0
    %154 = vmatprep.subr.mxu0 0.0
    %155 = vmatpush1.msra.mxu0 0.0
    %156 = vmatprep.subr.mxu0 0.0
    %157 = vmatpush1.msra.mxu0 0.0
    %158 = vmatprep.subr.mxu0 0.0
    %159 = vmatpush1.msra.mxu0 0.0
    %160 = vmatprep.subr.mxu0 0.0
    %161 = vmatpush1.msra.mxu0 0.0
    %162 = vmatprep.subr.mxu0 0.0
    %163 = vmatpush1.msra.mxu0 0.0
    %164 = vmatprep.subr.mxu0 0.0
    %165 = vmatpush1.msra.mxu0 0.0
    %166 = vmatprep.subr.mxu0 0.0
    %167 = vmatpush1.msra.mxu0 0.0
    %168 = vmatprep.subr.mxu0 0.0
    %169 = vmatpush1.msra.mxu0 0.0
    %170 = vmatprep.subr.mxu0 0.0
    %171 = vmatpush1.msra.mxu0 0.0
    %172 = vmatprep.subr.mxu0 0.0
    %173 = vmatpush1.msra.mxu0 0.0
    %174 = vmatprep.subr.mxu0 0.0
    %175 = vmatpush1.msra.mxu0 0.0
    %176 = vmatprep.subr.mxu0 0.0
    %177 = vmatpush1.msra.mxu0 0.0
    %178 = vmatprep.subr.mxu0 0.0
    %179 = vmatpush1.msra.mxu0 0.0
    %180 = vmatprep.subr.mxu0 0.0
    %181 = vmatpush1.msra.mxu0 0.0
    %182 = vmatprep.subr.mxu0 0.0
    %183 = vmatpush1.msra.mxu0 0.0
    %184 = vmatprep.subr.mxu0 0.0
    %185 = vmatpush1.msra.mxu0 0.0
    %186 = vmatprep.subr.mxu0 0.0
    %187 = vmatpush1.msra.mxu0 0.0
    %188 = vmatprep.subr.mxu0 0.0
    %189 = vmatpush1.msra.mxu0 0.0
    %190 = vmatprep.mubr.f32.mxu0 0.0
    %191 = vmatmul.mubr.f32.gmra.mrb[0].mxu0 %v124
    %v192 = vpop.f32.mrb[0].mxu0
    %v193 = vadd.f32 0.0, %v192
    %v194 = vpop.f32.mrb[0].mxu0
    %195 = vdwg.mxu0
    %vm196 = vcmask 64512
    %v198 = vsel %vm196, %v116, 0
    %200 = vmatprep.subr.mxu0 0.0
    %201 = vmatpush1.msra.mxu0 %v117
    %202 = vmatprep.subr.mxu0 0.0
    %203 = vmatpush1.msra.mxu0 0.0
    %204 = vmatprep.subr.mxu0 0.0
    %205 = vmatpush1.msra.mxu0 0.0
    %206 = vmatprep.subr.mxu0 0.0
    %207 = vmatpush1.msra.mxu0 0.0
    %208 = vmatprep.subr.mxu0 0.0
    %209 = vmatpush1.msra.mxu0 0.0
    %210 = vmatprep.subr.mxu0 0.0
    %211 = vmatpush1.msra.mxu0 0.0
    %212 = vmatprep.subr.mxu0 0.0
    %213 = vmatpush1.msra.mxu0 0.0
    %214 = vmatprep.subr.mxu0 0.0
    %215 = vmatpush1.msra.mxu0 0.0
    %216 = vmatprep.subr.mxu0 0.0
    %217 = vmatpush1.msra.mxu0 0.0
    %218 = vmatprep.subr.mxu0 0.0
    %219 = vmatpush1.msra.mxu0 0.0
    %220 = vmatprep.subr.mxu0 0.0
    %221 = vmatpush1.msra.mxu0 0.0
    %222 = vmatprep.subr.mxu0 0.0
    %223 = vmatpush1.msra.mxu0 0.0
    %224 = vmatprep.subr.mxu0 0.0
    %225 = vmatpush1.msra.mxu0 0.0
    %226 = vmatprep.subr.mxu0 0.0
    %227 = vmatpush1.msra.mxu0 0.0
    %228 = vmatprep.subr.mxu0 0.0
    %229 = vmatpush1.msra.mxu0 0.0
    %230 = vmatprep.subr.mxu0 0.0
    %231 = vmatpush1.msra.mxu0 0.0
    %232 = vmatprep.subr.mxu0 0.0
    %233 = vmatpush1.msra.mxu0 0.0
    %234 = vmatprep.subr.mxu0 0.0
    %235 = vmatpush1.msra.mxu0 0.0
    %236 = vmatprep.subr.mxu0 0.0
    %237 = vmatpush1.msra.mxu0 0.0
    %238 = vmatprep.subr.mxu0 0.0
    %239 = vmatpush1.msra.mxu0 0.0
    %240 = vmatprep.subr.mxu0 0.0
    %241 = vmatpush1.msra.mxu0 0.0
    %242 = vmatprep.subr.mxu0 0.0
    %243 = vmatpush1.msra.mxu0 0.0
    %244 = vmatprep.subr.mxu0 0.0
    %245 = vmatpush1.msra.mxu0 0.0
    %246 = vmatprep.subr.mxu0 0.0
    %247 = vmatpush1.msra.mxu0 0.0
    %248 = vmatprep.subr.mxu0 0.0
    %249 = vmatpush1.msra.mxu0 0.0
    %250 = vmatprep.subr.mxu0 0.0
    %251 = vmatpush1.msra.mxu0 0.0
    %252 = vmatprep.subr.mxu0 0.0
    %253 = vmatpush1.msra.mxu0 0.0
    %254 = vmatprep.subr.mxu0 0.0
    %255 = vmatpush1.msra.mxu0 0.0
    %256 = vmatprep.subr.mxu0 0.0
    %257 = vmatpush1.msra.mxu0 0.0
    %258 = vmatprep.subr.mxu0 0.0
    %259 = vmatpush1.msra.mxu0 0.0
    %260 = vmatprep.subr.mxu0 0.0
    %261 = vmatpush1.msra.mxu0 0.0
    %262 = vmatprep.subr.mxu0 0.0
    %263 = vmatpush1.msra.mxu0 0.0
    %264 = vmatprep.mubr.f32.mxu0 0.0
    %265 = vmatmul.mubr.f32.gmra.mrb[0].mxu0 %v198
    %v266 = vpop.f32.mrb[0].mxu0
    %v267 = vadd.f32 %v193, %v266
    %v268 = vpop.f32.mrb[0].mxu0
    %269 = vdwg.mxu0
    %v270 = vld [vmem:[%s5] sm:$0xff]
    %v271 = vld [vmem:[%s5 + $0x8] sm:$0xff]
    %v274 = vsel %vm122, %v115, %v108
    %v275 = vsel %vm34, %v274, 0
    %277 = vmatprep.subr.mxu0 0.0
    %278 = vmatpush1.msra.mxu0 %v270
    %279 = vmatprep.subr.mxu0 0.0
    %280 = vmatpush1.msra.mxu0 %v271
    %281 = vmatprep.subr.mxu0 0.0
    %282 = vmatpush1.msra.mxu0 0.0
    %283 = vmatprep.subr.mxu0 0.0
    %284 = vmatpush1.msra.mxu0 0.0
    %285 = vmatprep.subr.mxu0 0.0
    %286 = vmatpush1.msra.mxu0 0.0
    %287 = vmatprep.subr.mxu0 0.0
    %288 = vmatpush1.msra.mxu0 0.0
    %289 = vmatprep.subr.mxu0 0.0
    %290 = vmatpush1.msra.mxu0 0.0
    %291 = vmatprep.subr.mxu0 0.0
    %292 = vmatpush1.msra.mxu0 0.0
    %293 = vmatprep.subr.mxu0 0.0
    %294 = vmatpush1.msra.mxu0 0.0
    %295 = vmatprep.subr.mxu0 0.0
    %296 = vmatpush1.msra.mxu0 0.0
    %297 = vmatprep.subr.mxu0 0.0
    %298 = vmatpush1.msra.mxu0 0.0
    %299 = vmatprep.subr.mxu0 0.0
    %300 = vmatpush1.msra.mxu0 0.0
    %301 = vmatprep.subr.mxu0 0.0
    %302 = vmatpush1.msra.mxu0 0.0
    %303 = vmatprep.subr.mxu0 0.0
    %304 = vmatpush1.msra.mxu0 0.0
    %305 = vmatprep.subr.mxu0 0.0
    %306 = vmatpush1.msra.mxu0 0.0
    %307 = vmatprep.subr.mxu0 0.0
    %308 = vmatpush1.msra.mxu0 0.0
    %309 = vmatprep.subr.mxu0 0.0
    %310 = vmatpush1.msra.mxu0 0.0
    %311 = vmatprep.subr.mxu0 0.0
    %312 = vmatpush1.msra.mxu0 0.0
    %313 = vmatprep.subr.mxu0 0.0
    %314 = vmatpush1.msra.mxu0 0.0
    %315 = vmatprep.subr.mxu0 0.0
    %316 = vmatpush1.msra.mxu0 0.0
    %317 = vmatprep.subr.mxu0 0.0
    %318 = vmatpush1.msra.mxu0 0.0
    %319 = vmatprep.subr.mxu0 0.0
    %320 = vmatpush1.msra.mxu0 0.0
    %321 = vmatprep.subr.mxu0 0.0
    %322 = vmatpush1.msra.mxu0 0.0
    %323 = vmatprep.subr.mxu0 0.0
    %324 = vmatpush1.msra.mxu0 0.0
    %325 = vmatprep.subr.mxu0 0.0
    %326 = vmatpush1.msra.mxu0 0.0
    %327 = vmatprep.subr.mxu0 0.0
    %328 = vmatpush1.msra.mxu0 0.0
    %329 = vmatprep.subr.mxu0 0.0
    %330 = vmatpush1.msra.mxu0 0.0
    %331 = vmatprep.subr.mxu0 0.0
    %332 = vmatpush1.msra.mxu0 0.0
    %333 = vmatprep.subr.mxu0 0.0
    %334 = vmatpush1.msra.mxu0 0.0
    %335 = vmatprep.subr.mxu0 0.0
    %336 = vmatpush1.msra.mxu0 0.0
    %337 = vmatprep.subr.mxu0 0.0
    %338 = vmatpush1.msra.mxu0 0.0
    %339 = vmatprep.subr.mxu0 0.0
    %340 = vmatpush1.msra.mxu0 0.0
    %341 = vmatprep.mubr.f32.mxu0 0.0
    %342 = vmatmul.mubr.f32.gmra.mrb[0].mxu0 %v275
    %v343 = vpop.f32.mrb[0].mxu0
    %v344 = vadd.f32 0.0, %v343
    %v345 = vpop.f32.mrb[0].mxu0
    %346 = vdwg.mxu0
    %v347 = vadd.f32 %v267, %v344
    %v348 = vld [vmem:[%s6] sm:$0xff]
    %v349 = vld [vmem:[%s6 + $0x8] sm:$0xff]
    %v352 = vsel %vm122, %v73, %v64
    %v353 = vsel %vm34, %v352, 0
    %355 = vmatprep.subr.mxu0 0.0
    %356 = vmatpush1.msra.mxu0 %v348
    %357 = vmatprep.subr.mxu0 0.0
    %358 = vmatpush1.msra.mxu0 %v349
    %359 = vmatprep.subr.mxu0 0.0
    %360 = vmatpush1.msra.mxu0 0.0
    %361 = vmatprep.subr.mxu0 0.0
    %362 = vmatpush1.msra.mxu0 0.0
    %363 = vmatprep.subr.mxu0 0.0
    %364 = vmatpush1.msra.mxu0 0.0
    %365 = vmatprep.subr.mxu0 0.0
    %366 = vmatpush1.msra.mxu0 0.0
    %367 = vmatprep.subr.mxu0 0.0
    %368 = vmatpush1.msra.mxu0 0.0
    %369 = vmatprep.subr.mxu0 0.0
    %370 = vmatpush1.msra.mxu0 0.0
    %371 = vmatprep.subr.mxu0 0.0
    %372 = vmatpush1.msra.mxu0 0.0
    %373 = vmatprep.subr.mxu0 0.0
    %374 = vmatpush1.msra.mxu0 0.0
    %375 = vmatprep.subr.mxu0 0.0
    %376 = vmatpush1.msra.mxu0 0.0
    %377 = vmatprep.subr.mxu0 0.0
    %378 = vmatpush1.msra.mxu0 0.0
    %379 = vmatprep.subr.mxu0 0.0
    %380 = vmatpush1.msra.mxu0 0.0
    %381 = vmatprep.subr.mxu0 0.0
    %382 = vmatpush1.msra.mxu0 0.0
    %383 = vmatprep.subr.mxu0 0.0
    %384 = vmatpush1.msra.mxu0 0.0
    %385 = vmatprep.subr.mxu0 0.0
    %386 = vmatpush1.msra.mxu0 0.0
    %387 = vmatprep.subr.mxu0 0.0
    %388 = vmatpush1.msra.mxu0 0.0
    %389 = vmatprep.subr.mxu0 0.0
    %390 = vmatpush1.msra.mxu0 0.0
    %391 = vmatprep.subr.mxu0 0.0
    %392 = vmatpush1.msra.mxu0 0.0
    %393 = vmatprep.subr.mxu0 0.0
    %394 = vmatpush1.msra.mxu0 0.0
    %395 = vmatprep.subr.mxu0 0.0
    %396 = vmatpush1.msra.mxu0 0.0
    %397 = vmatprep.subr.mxu0 0.0
    %398 = vmatpush1.msra.mxu0 0.0
    %399 = vmatprep.subr.mxu0 0.0
    %400 = vmatpush1.msra.mxu0 0.0
    %401 = vmatprep.subr.mxu0 0.0
    %402 = vmatpush1.msra.mxu0 0.0
    %403 = vmatprep.subr.mxu0 0.0
    %404 = vmatpush1.msra.mxu0 0.0
    %405 = vmatprep.subr.mxu0 0.0
    %406 = vmatpush1.msra.mxu0 0.0
    %407 = vmatprep.subr.mxu0 0.0
    %408 = vmatpush1.msra.mxu0 0.0
    %409 = vmatprep.subr.mxu0 0.0
    %410 = vmatpush1.msra.mxu0 0.0
    %411 = vmatprep.subr.mxu0 0.0
    %412 = vmatpush1.msra.mxu0 0.0
    %413 = vmatprep.subr.mxu0 0.0
    %414 = vmatpush1.msra.mxu0 0.0
    %415 = vmatprep.subr.mxu0 0.0
    %416 = vmatpush1.msra.mxu0 0.0
    %417 = vmatprep.subr.mxu0 0.0
    %418 = vmatpush1.msra.mxu0 0.0
    %419 = vmatprep.mubr.f32.mxu0 0.0
    %420 = vmatmul.mubr.f32.gmra.mrb[0].mxu0 %v353
    %v421 = vpop.f32.mrb[0].mxu0
    %v422 = vadd.f32 0.0, %v421
    %v423 = vpop.f32.mrb[0].mxu0
    %424 = vdwg.mxu0
    %v425 = vadd.f32 %v347, %v422
    %v426 = vld [vmem:[%s7] sm:$0x1]
    %v428 = vlaneseq
    %v429 = vshrl.u32 %v428, 7
    %v430 = vsub.s32 0, %v429
    %v431 = vrot.slane %v426, %v430
    %v433 = vadd.f32 %v425, %v431
    %v434 = vld [vmem:[%s2] sm:$0x3f]
    %v435 = vld [vmem:[%s2 + $0x8] sm:$0x3f]
    %v438 = vunpack.c.l.s4 1966171168
    %v439 = vunpack.c.0.s8 %v438
    %v440 = vlaneseq
    %v441 = vshrl.u32 %v440, 7
    %v442 = vsub.s32 %v439, %v441
    %v443 = vrot.slane %v433, %v442
    %v444 = vcombine.high %v443, %v443
    %v446 = vunpack.c.l.s4 1966171168
    %v447 = vunpack.c.0.s8 %v446
    %v448 = vlaneseq
    %v449 = vshrl.u32 %v448, 7
    %v450 = vsub.s32 %v447, %v449
    %v451 = vrot.slane %v443, %v450
    %v453 = vunpack.c.l.s4 1966171168
    %v454 = vunpack.c.0.s8 %v453
    %v455 = vlaneseq
    %v456 = vshrl.u32 %v455, 7
    %v457 = vsub.s32 %v454, %v456
    %v458 = vrot.slane %v444, %v457
    %v459 = vlaneseq
    %v460 = vshrl.u32 %v459, 7
    %v461 = vsub.s32 0, %v460
    %v462 = vrot.slane %v451, %v461
    %v463 = vlaneseq
    %v464 = vshrl.u32 %v463, 7
    %v465 = vsub.s32 0, %v464
    %v466 = vrot.slane %v458, %v465
    %v469 = vmul.f32 %v434, %v462
    %v470 = vmul.f32 %v435, %v466
    %vm471 = vcmask 128000
    %v472 = vsel %vm471, %v469, 0.0
    %473 = vadd.xlane.f32.xlu0 %v472
    %v474 = vpop.xlane.xlu0 %473
    %v475 = vsel %vm471, %v470, 0.0
    %476 = vadd.xlane.f32.xlu0 %v475
    %v477 = vpop.xlane.xlu0 %476
    %v480 = vlaneseq
    %v481 = vand.u32 %v480, 127
    %v482 = vlaneseq
    %v483 = vshrl.u32 %v482, 7
    %v484 = vsub.s32 %v481, %v483
    %v485 = vrot.slane %v474, %v484
    %v486 = vlaneseq
    %v487 = vshrl.u32 %v486, 7
    %v488 = vsub.s32 %v481, %v487
    %v489 = vrot.slane %v477, %v488
    %v490 = vsel %vm122, %v489, %v485
    %vm492 = vcmask 41984
    %493 = vst.msk [vmem:[#allocation2] sm:$0x3] %vm492, %v490
    // Predicated region
    $region34: #{tpu_custom_call.1} parent=1 // pred_check
      _
    $region35: #{tpu_custom_call.1} parent=1 // pred_check_branch
      %495 = sbr.rel (0) target = $region37
    $region36: #{tpu_custom_call.1} parent=1 // pred_region
      %s497 = ssub.s32 32, 32
      %498 = vsyncadd [#allocation3], %s497
      %s500 = sshll.u32 [#allocation2], 4
      %s501 = int_to_ptr.vmem [resolvable:$true] %s500
      %503 = dma.vmem_to_hbm [thread:$0]  %s501, 32, %s8, [#allocation3]
    $region37: #{tpu_custom_call.1} parent=1 // pred_fallthru
      _
    // Predicated region
    $region38: #{tpu_custom_call.1} parent=1 // pred_check
      _
    $region39: #{tpu_custom_call.1} parent=1 // pred_check_branch
      %505 = sbr.rel (0) target = $region41
    $region40: #{tpu_custom_call.1} parent=1 // pred_region
      %506 = dma.done [#allocation3], 32
    $region41: #{tpu_custom_call.1} parent=1 // pred_fallthru
      _
    %507 = vsyncpa [#allocation3], 1

</llo_original>
